<compile_context>
chip_gen: v7x
topology: tpu7x:2x2x1
jax: 0.10.0
libtpu: 0.0.40
codegen_flags: <defaults>
</compile_context>

<pallas_src>
import functools
from dataclasses import dataclass, field

import jax
import jax.numpy as jnp
from jax.experimental import pallas as pl
from jax.experimental.pallas import tpu as pltpu


# ----------------------------- config glue ---------------------------------
@dataclass
class _ModelCfg:
    num_parts: int = 6
    max_or_avg: str = "avg"


@dataclass
class Cfg:
    model: _ModelCfg = field(default_factory=_ModelCfg)


# ------------------------------ Pallas kernel -------------------------------
def _pcb_pool_kernel(feat_ref, out_ref, *, num_parts, height, width, use_avg):
    """feat_ref: (Bn, H*W, C) VMEM tile. out_ref: (Bn, num_parts, C)."""
    parts = []
    for p in range(num_parts):
        # PyTorch adaptive pooling bin boundaries (static per part).
        start = (p * height) // num_parts
        end = -(-((p + 1) * height) // num_parts)  # ceil div
        # Static slice of the Ref: only the rows of this bin are loaded.
        seg = feat_ref[:, start * width:end * width, :]  # (Bn, bin*W, C)
        if use_avg:
            inv = 1.0 / float((end - start) * width)
            v = jnp.sum(seg, axis=1, dtype=jnp.float32) * inv  # (Bn, C) f32
        else:
            v = jnp.max(seg, axis=1)  # (Bn, C)
        parts.append(v)
    out = jnp.stack(parts, axis=1)  # (Bn, P, C) — lane-dense store
    out_ref[...] = out.astype(out_ref.dtype)


def pcb_pool_pallas(feat, *, num_parts, max_or_avg="avg"):
    """feat: (N, C, H, W) -> (N, C, num_parts, 1)."""
    N, C, H, W = feat.shape
    use_avg = max_or_avg == "avg"

    # Wrapper-side re-layout: channels on the lane axis.
    feat_r = jnp.transpose(feat, (0, 2, 3, 1)).reshape(N, H * W, C)

    # Batch images per grid step: keep the double-buffered input block around
    # ~12 MiB total (safe for v5e 16 MiB default scoped VMEM and v7x 64 MiB
    # physical VMEM).
    itemsize = jnp.dtype(feat.dtype).itemsize
    budget_bytes = 6 * 1024 * 1024
    per_image_bytes = max(1, H * W * C * itemsize)
    bn = max(1, min(N, budget_bytes // per_image_bytes))
    # Give megacore (v7x: 2 TCs) at least 2 grid steps when possible.
    if N >= 2 and pl.cdiv(N, bn) < 2:
        bn = pl.cdiv(N, 2)
    grid_n = pl.cdiv(N, bn)

    kernel = functools.partial(
        _pcb_pool_kernel,
        num_parts=num_parts,
        height=H,
        width=W,
        use_avg=use_avg,
    )

    pooled = pl.pallas_call(
        kernel,
        out_shape=jax.ShapeDtypeStruct((N, num_parts, C), feat.dtype),
        grid=(grid_n,),
        in_specs=[pl.BlockSpec((bn, H * W, C), lambda n: (n, 0, 0))],
        out_specs=pl.BlockSpec((bn, num_parts, C), lambda n: (n, 0, 0)),
        compiler_params=pltpu.CompilerParams(
            dimension_semantics=("parallel",),
            vmem_limit_bytes=32 * 1024 * 1024,
        ),
    )(feat_r)

    # Tiny final re-layout in plain XLA: (N, P, C) -> (N, C, P, 1).
    return jnp.transpose(pooled, (0, 2, 1))[..., None]


# ------------------------------ module wrapper -------------------------------
class PCBPool:
    """JAX/Pallas port of MDRSREID PCBPool (no learnable parameters)."""

    def __init__(self, cfg: Cfg):
        self.cfg = cfg

    def __call__(self, in_dict):
        feat = in_dict["feat"]
        pool_feat = pcb_pool_pallas(
            feat,
            num_parts=self.cfg.model.num_parts,
            max_or_avg=self.cfg.model.max_or_avg,
        )
        return {"pool_feat": pool_feat}


# ------------------------------ reference (JAX) ------------------------------
def _ref_adaptive_pool(feat, num_parts, max_or_avg):
    N, C, H, W = feat.shape
    cols = []
    for p in range(num_parts):
        s = (p * H) // num_parts
        e = -(-((p + 1) * H) // num_parts)
        seg = feat[:, :, s:e, :]
        if max_or_avg == "avg":
            cols.append(jnp.mean(seg.astype(jnp.float32), axis=(2, 3)))
        else:
            cols.append(jnp.max(seg, axis=(2, 3)))
    return jnp.stack(cols, axis=-1)[..., None].astype(feat.dtype)


# ----------------------------------- main ------------------------------------
if __name__ == "__main__":
    key = jax.random.PRNGKey(0)
    # Small PCB-like feature map: (N, C, H, W)
    feat = jax.random.normal(key, (2, 4, 16, 16), dtype=jnp.float32)

    # Average-pool path (default cfg).
    cfg_avg = Cfg(model=_ModelCfg(num_parts=6, max_or_avg="avg"))
    out_avg = PCBPool(cfg_avg)({"feat": feat})["pool_feat"]
    out_avg = jax.block_until_ready(out_avg)
    exp_avg = _ref_adaptive_pool(feat, 6, "avg")
    assert out_avg.shape == (2, 4, 6, 1), out_avg.shape
    assert jnp.allclose(out_avg, exp_avg, atol=1e-5, rtol=1e-5)

    # Max-pool path.
    cfg_max = Cfg(model=_ModelCfg(num_parts=6, max_or_avg="max"))
    out_max = PCBPool(cfg_max)({"feat": feat})["pool_feat"]
    out_max = jax.block_until_ready(out_max)
    exp_max = _ref_adaptive_pool(feat, 6, "max")
    assert out_max.shape == (2, 4, 6, 1), out_max.shape
    assert jnp.allclose(out_max, exp_max, atol=1e-5, rtol=1e-5)

    print("KERNEL_OK")
</pallas_src>

<mosaic_0001>
module attributes {stable_mosaic.version = 11 : i64} {
  func.func @_pcb_pool_kernel(%arg0: i32, %arg1: memref<1x256x4xf32, #tpu.memory_space<vmem>>, %arg2: memref<1x6x4xf32, #tpu.memory_space<vmem>>) attributes {dimension_semantics = [#tpu.dimension_semantics<parallel>], iteration_bounds = array<i64: 2>, scalar_prefetch = 0 : i64, scratch_operands = 0 : i64, tpu.core_type = #tpu.core_type<tc>, window_params = [{transform_indices = @transform_0, window_bounds = array<i64: 1, 256, 4>}, {transform_indices = @transform_1, window_bounds = array<i64: 1, 6, 4>}]} {
    %c0 = arith.constant 0 : index
    %c0_0 = arith.constant 0 : index
    %c0_1 = arith.constant 0 : index
    %0 = vector.load %arg1[%c0, %c0_0, %c0_1] : memref<1x256x4xf32, #tpu.memory_space<vmem>>, vector<1x48x4xf32>
    %cst = arith.constant dense<0.000000e+00> : vector<1x4xf32>
    %1 = vector.multi_reduction <add>, %0, %cst [1] : vector<1x48x4xf32> to vector<1x4xf32>
    %cst_2 = arith.constant 0.020833334 : f32
    %2 = vector.broadcast %cst_2 : f32 to vector<1x4xf32>
    %3 = arith.mulf %1, %2 : vector<1x4xf32>
    %c0_3 = arith.constant 0 : index
    %c32 = arith.constant 32 : index
    %c0_4 = arith.constant 0 : index
    %4 = vector.load %arg1[%c0_3, %c32, %c0_4] : memref<1x256x4xf32, #tpu.memory_space<vmem>>, vector<1x64x4xf32>
    %cst_5 = arith.constant dense<0.000000e+00> : vector<1x4xf32>
    %5 = vector.multi_reduction <add>, %4, %cst_5 [1] : vector<1x64x4xf32> to vector<1x4xf32>
    %cst_6 = arith.constant 1.562500e-02 : f32
    %6 = vector.broadcast %cst_6 : f32 to vector<1x4xf32>
    %7 = arith.mulf %5, %6 : vector<1x4xf32>
    %c0_7 = arith.constant 0 : index
    %c80 = arith.constant 80 : index
    %c0_8 = arith.constant 0 : index
    %8 = vector.load %arg1[%c0_7, %c80, %c0_8] : memref<1x256x4xf32, #tpu.memory_space<vmem>>, vector<1x48x4xf32>
    %cst_9 = arith.constant dense<0.000000e+00> : vector<1x4xf32>
    %9 = vector.multi_reduction <add>, %8, %cst_9 [1] : vector<1x48x4xf32> to vector<1x4xf32>
    %cst_10 = arith.constant 0.020833334 : f32
    %10 = vector.broadcast %cst_10 : f32 to vector<1x4xf32>
    %11 = arith.mulf %9, %10 : vector<1x4xf32>
    %c0_11 = arith.constant 0 : index
    %c128 = arith.constant 128 : index
    %c0_12 = arith.constant 0 : index
    %12 = vector.load %arg1[%c0_11, %c128, %c0_12] : memref<1x256x4xf32, #tpu.memory_space<vmem>>, vector<1x48x4xf32>
    %cst_13 = arith.constant dense<0.000000e+00> : vector<1x4xf32>
    %13 = vector.multi_reduction <add>, %12, %cst_13 [1] : vector<1x48x4xf32> to vector<1x4xf32>
    %cst_14 = arith.constant 0.020833334 : f32
    %14 = vector.broadcast %cst_14 : f32 to vector<1x4xf32>
    %15 = arith.mulf %13, %14 : vector<1x4xf32>
    %c0_15 = arith.constant 0 : index
    %c160 = arith.constant 160 : index
    %c0_16 = arith.constant 0 : index
    %16 = vector.load %arg1[%c0_15, %c160, %c0_16] : memref<1x256x4xf32, #tpu.memory_space<vmem>>, vector<1x64x4xf32>
    %cst_17 = arith.constant dense<0.000000e+00> : vector<1x4xf32>
    %17 = vector.multi_reduction <add>, %16, %cst_17 [1] : vector<1x64x4xf32> to vector<1x4xf32>
    %cst_18 = arith.constant 1.562500e-02 : f32
    %18 = vector.broadcast %cst_18 : f32 to vector<1x4xf32>
    %19 = arith.mulf %17, %18 : vector<1x4xf32>
    %c0_19 = arith.constant 0 : index
    %c208 = arith.constant 208 : index
    %c0_20 = arith.constant 0 : index
    %20 = vector.load %arg1[%c0_19, %c208, %c0_20] : memref<1x256x4xf32, #tpu.memory_space<vmem>>, vector<1x48x4xf32>
    %cst_21 = arith.constant dense<0.000000e+00> : vector<1x4xf32>
    %21 = vector.multi_reduction <add>, %20, %cst_21 [1] : vector<1x48x4xf32> to vector<1x4xf32>
    %cst_22 = arith.constant 0.020833334 : f32
    %22 = vector.broadcast %cst_22 : f32 to vector<1x4xf32>
    %23 = arith.mulf %21, %22 : vector<1x4xf32>
    %24 = vector.shape_cast %3 : vector<1x4xf32> to vector<1x1x4xf32>
    %25 = vector.shape_cast %7 : vector<1x4xf32> to vector<1x1x4xf32>
    %26 = vector.shape_cast %11 : vector<1x4xf32> to vector<1x1x4xf32>
    %27 = vector.shape_cast %15 : vector<1x4xf32> to vector<1x1x4xf32>
    %28 = vector.shape_cast %19 : vector<1x4xf32> to vector<1x1x4xf32>
    %29 = vector.shape_cast %23 : vector<1x4xf32> to vector<1x1x4xf32>
    %30 = tpu.concatenate %24, %25, %26, %27, %28, %29 in 1 : vector<1x1x4xf32>, vector<1x1x4xf32>, vector<1x1x4xf32>, vector<1x1x4xf32>, vector<1x1x4xf32>, vector<1x1x4xf32> -> vector<1x6x4xf32>
    %c0_23 = arith.constant 0 : index
    %c0_24 = arith.constant 0 : index
    %c0_25 = arith.constant 0 : index
    %31 = vector.load %arg2[%c0_23, %c0_24, %c0_25] : memref<1x6x4xf32, #tpu.memory_space<vmem>>, vector<1x6x4xf32>
    tpu.vector_store %arg2[%c0_23, %c0_24, %c0_25], %30 {strides = array<i32>} : memref<1x6x4xf32, #tpu.memory_space<vmem>>, vector<1x6x4xf32>,
    return
  }
  func.func @transform_0(%arg0: i32) -> (i32, i32, i32) {
    %c0_i32 = arith.constant 0 : i32
    %c0_i32_0 = arith.constant 0 : i32
    %c0_i32_1 = arith.constant 0 : i32
    return %arg0, %c0_i32, %c0_i32_0 : i32, i32, i32
  }
  func.func @transform_1(%arg0: i32) -> (i32, i32, i32) {
    %c0_i32 = arith.constant 0 : i32
    %c0_i32_0 = arith.constant 0 : i32
    %c0_i32_1 = arith.constant 0 : i32
    return %arg0, %c0_i32, %c0_i32_0 : i32, i32, i32
  }
}

</mosaic_0001>

<llo_original>
// kernel: tpu_custom_call.1
$region0: #{tpu_custom_call.1}
  #allocation0 [shape = 'u32[]', space=smem, size = 0x4, offset = 0x4, fixed_abs, tag = 'smem constant byte address 0x4 - core index']
  #allocation1 [shape = 'u32[144,128]{1,0:T(1,128)}', space=vmem, size = 0x12000, scoped, tag = 'internal scratch']
  %s0 = inlined_call_operand.vmem [shape: f32[2,256,4], index: 0, kind: input, shape index: {}]
  %s1 = inlined_call_operand.vmem [shape: f32[2,6,4], index: 1, kind: output, shape index: {}]
  %s2 = sld [smem:[#allocation0]]
  $region37: #{tpu_custom_call.1} parent=0
    _
  %s4 = ssub.s32 1, %s2
  %s5 = scalar_select 0, %s4, %s2
  loop: start=0, step=1, limit=4
  $region2: #{tpu_custom_call.1} parent=0 // loop_pre_header
    _
  $region3: #{tpu_custom_call.1} parent=0 // loop_header
    %s7 = sphi 0, %s11
    %p8 = scmp.ge.s32.totalorder %s7, 4
    %s17 = sphi 0, %s19
    %s20 = sphi 0, %s17
    %s21 = sphi 0, %s20
    %s37 = sphi 0, %s21
    %s43 = sphi 0, %s45
    %s46 = sphi 0, %s43
    %s47 = sphi 0, %s46
    %s63 = sphi 0, %s47
  $region4: #{tpu_custom_call.1} parent=0 // loop_header_branch
    %10 = sbr.rel (%p8) target = $region8
  $region5: #{tpu_custom_call.1} parent=0 // loop_body
    %s12 = ssub.s32 %s7, 1
    %s13 = ssub.s32 %s7, 2
    %s14 = sadd.s32 %s7, 1
    %s15 = ssub.s32 %s7, %s14
    %p16 = scmp.eq.s32.totalorder %s15, 0
    %s18 = sadd.s32 %s17, 1
    %s19 = scalar_select %p16, %s17, %s18
    %p22 = pneg %p16
    %p23 = scmp.eq.s32.totalorder %s7, 1
    %p24 = por %p22, %p23
    %p25 = scmp.ne.s32.totalorder %s17, %s20
    %p26 = scmp.eq.s32.totalorder %s7, 0
    %p27 = por %p25, %p26
    %p28 = scmp.ne.s32.totalorder %s17, %s20
    %p29 = scmp.eq.s32.totalorder %s12, 1
    %p30 = por %p28, %p29
    %p31 = scmp.ne.s32.totalorder %s20, %s21
    %p32 = scmp.eq.s32.totalorder %s12, 0
    %p33 = por %p31, %p32
    %p34 = scmp.ne.s32.totalorder %s20, %s21
    %p35 = scmp.eq.s32.totalorder %s13, 1
    %p36 = por %p34, %p35
    %p38 = scmp.ne.s32.totalorder %s21, %s37
    %p39 = scmp.eq.s32.totalorder %s13, 0
    %p40 = por %p38, %p39
    %s41 = ssub.s32 %s7, %s14
    %p42 = scmp.eq.s32.totalorder %s41, 0
    %s44 = sadd.s32 %s43, 1
    %s45 = scalar_select %p42, %s43, %s44
    %p48 = pneg %p42
    %p49 = scmp.eq.s32.totalorder %s7, 1
    %p50 = por %p48, %p49
    %p51 = scmp.ne.s32.totalorder %s43, %s46
    %p52 = scmp.eq.s32.totalorder %s7, 0
    %p53 = por %p51, %p52
    %p54 = scmp.ne.s32.totalorder %s43, %s46
    %p55 = scmp.eq.s32.totalorder %s12, 1
    %p56 = por %p54, %p55
    %p57 = scmp.ne.s32.totalorder %s46, %s47
    %p58 = scmp.eq.s32.totalorder %s12, 0
    %p59 = por %p57, %p58
    %p60 = scmp.ne.s32.totalorder %s46, %s47
    %p61 = scmp.eq.s32.totalorder %s13, 1
    %p62 = por %p60, %p61
    %p64 = scmp.ne.s32.totalorder %s47, %s63
    %p65 = scmp.eq.s32.totalorder %s13, 0
    %p66 = por %p64, %p65
    %p67 = scmp.le.s32.totalorder 1, %s7
    %p68 = scmp.lt.s32.totalorder %s7, 3
    %p69 = pnand %p67, %p68
    %p70 = pneg %p69
    // Predicated region
    $region9: #{tpu_custom_call.1} parent=5 // pred_check
      _
    $region10: #{tpu_custom_call.1} parent=5 // pred_check_branch
      %72 = sbr.rel (%p69) target = $region12
    $region11: #{tpu_custom_call.1} parent=5 // pred_region
      %s73 = ssub.s32 %s7, 1
    $region12: #{tpu_custom_call.1} parent=5 // pred_fallthru
      _
    %p74 = scmp.lt.s32.totalorder %s7, 2
    // Predicated region
    $region13: #{tpu_custom_call.1} parent=5 // pred_check
      %p75 = pneg %p74
    $region14: #{tpu_custom_call.1} parent=5 // pred_check_branch
      %77 = sbr.rel (%p75) target = $region16
    $region15: #{tpu_custom_call.1} parent=5 // pred_region
      // Predicated region
      $region17: #{tpu_custom_call.1} parent=15 // pred_check
        %p78 = pneg %p27
      $region18: #{tpu_custom_call.1} parent=15 // pred_check_branch
        %80 = sbr.rel (%p78) target = $region20
      $region19: #{tpu_custom_call.1} parent=15 // pred_region
        %p81 = scmp.lt.s32.totalorder %s7, 1
        %s82 = scalar_select %p81, %s7, 1
        %s83 = smul.addr %s82, 32
        %s84 = smul.addr %s83, 8
        %s85 = scalar_lea.vmem %s0, %s84
      $region20: #{tpu_custom_call.1} parent=15 // pred_fallthru
        _
    $region16: #{tpu_custom_call.1} parent=5 // pred_fallthru
      _
    %p86 = scmp.le.s32.totalorder 1, %s7
    %p87 = scmp.lt.s32.totalorder %s7, 3
    %p88 = pnand %p86, %p87
    %p89 = pneg %p88
    // Predicated region
    $region21: #{tpu_custom_call.1} parent=5 // pred_check
      _
    $region22: #{tpu_custom_call.1} parent=5 // pred_check_branch
      %91 = sbr.rel (%p88) target = $region24
    $region23: #{tpu_custom_call.1} parent=5 // pred_region
      %s92 = ssub.s32 %s7, 1
      %p93 = scmp.lt.s32.totalorder %s12, 1
      %s94 = scalar_select %p93, %s12, 1
      %s95 = smul.addr %s94, 32
      %s96 = smul.addr %s95, 8
      %s97 = scalar_lea.vmem %s0, %s96
      %p98 = pneg %p33
      %p99 = pneg %p30
      %p100 = pneg %p59
      %p101 = pneg %p56
      %p102 = scmp.lt.s32.totalorder %s12, 1
      %s103 = scalar_select %p102, %s12, 1
      %s104 = smul.addr %s103, 8
      %s105 = scalar_lea.vmem %s1, %s104
      %p106 = scmp.lt.s32.totalorder %s12, 1
      %s107 = scalar_select %p106, %s12, 1
      %s108 = smul.addr %s107, 32
      %s109 = smul.addr %s108, 8
      %s110 = scalar_lea.vmem %s0, %s109
      %p111 = scmp.lt.s32.totalorder %s12, 1
      %s112 = scalar_select %p111, %s12, 1
      %s113 = smul.addr %s112, 8
      %s114 = scalar_lea.vmem %s1, %s113
      %v115 = vld [vmem:[%s110] sm:$0xff]
      %v116 = vld [vmem:[%s110 + $0x8] sm:$0xff]
      %v117 = vld [vmem:[%s110 + $0x10] sm:$0xff]
      %v118 = vld [vmem:[%s110 + $0x18] sm:$0xff]
      %v119 = vld [vmem:[%s110 + $0x20] sm:$0xff]
      %v120 = vld [vmem:[%s110 + $0x28] sm:$0xff]
      %vm121 = vcmask 31744
      %v122 = vsel %vm121, %v115, 0.0
      %v123 = vsel %vm121, %v116, 0.0
      %v124 = vadd.f32 %v122, %v123
      %v125 = vsel %vm121, %v117, 0.0
      %v126 = vadd.f32 %v124, %v125
      %v127 = vsel %vm121, %v118, 0.0
      %v128 = vadd.f32 %v126, %v127
      %v129 = vsel %vm121, %v119, 0.0
      %v130 = vadd.f32 %v128, %v129
      %v131 = vsel %vm121, %v120, 0.0
      %v132 = vadd.f32 %v130, %v131
      %v133 = vrot.slane %v132, 4
      %v134 = vadd.f32 %v132, %v133
      %v135 = vrot.slane %v134, 2
      %v136 = vadd.f32 %v134, %v135
      %v137 = vrot.slane %v136, 1
      %v138 = vadd.f32 %v136, %v137
      %v139 = vmul.f32 %v138, 0.020833334
      %v140 = vld [vmem:[%s110 + $0x30] sm:$0xff]
      %v141 = vld [vmem:[%s110 + $0x38] sm:$0xff]
      %v142 = vld [vmem:[%s110 + $0x40] sm:$0xff]
      %v143 = vld [vmem:[%s110 + $0x48] sm:$0xff]
      %v144 = vld [vmem:[%s110 + $0x50] sm:$0xff]
      %v145 = vld [vmem:[%s110 + $0x58] sm:$0xff]
      %v146 = vadd.f32 %v129, %v131
      %v147 = vsel %vm121, %v140, 0.0
      %v148 = vadd.f32 %v146, %v147
      %v149 = vsel %vm121, %v141, 0.0
      %v150 = vadd.f32 %v148, %v149
      %v151 = vsel %vm121, %v142, 0.0
      %v152 = vadd.f32 %v150, %v151
      %v153 = vsel %vm121, %v143, 0.0
      %v154 = vadd.f32 %v152, %v153
      %v155 = vsel %vm121, %v144, 0.0
      %v156 = vadd.f32 %v154, %v155
      %v157 = vsel %vm121, %v145, 0.0
      %v158 = vadd.f32 %v156, %v157
      %v159 = vrot.slane %v158, 4
      %v160 = vadd.f32 %v158, %v159
      %v161 = vrot.slane %v160, 2
      %v162 = vadd.f32 %v160, %v161
      %v163 = vrot.slane %v162, 1
      %v164 = vadd.f32 %v162, %v163
      %v165 = vmul.f32 %v164, 0.015625
      %v166 = vld [vmem:[%s110 + $0x60] sm:$0xff]
      %v167 = vld [vmem:[%s110 + $0x68] sm:$0xff]
      %v168 = vld [vmem:[%s110 + $0x70] sm:$0xff]
      %v169 = vld [vmem:[%s110 + $0x78] sm:$0xff]
      %v170 = vadd.f32 %v155, %v157
      %v171 = vsel %vm121, %v166, 0.0
      %v172 = vadd.f32 %v170, %v171
      %v173 = vsel %vm121, %v167, 0.0
      %v174 = vadd.f32 %v172, %v173
      %v175 = vsel %vm121, %v168, 0.0
      %v176 = vadd.f32 %v174, %v175
      %v177 = vsel %vm121, %v169, 0.0
      %v178 = vadd.f32 %v176, %v177
      %v179 = vrot.slane %v178, 4
      %v180 = vadd.f32 %v178, %v179
      %v181 = vrot.slane %v180, 2
      %v182 = vadd.f32 %v180, %v181
      %v183 = vrot.slane %v182, 1
      %v184 = vadd.f32 %v182, %v183
      %v185 = vmul.f32 %v184, 0.020833334
      %v186 = vld [vmem:[%s110 + $0x80] sm:$0xff]
      %v187 = vld [vmem:[%s110 + $0x88] sm:$0xff]
      %v188 = vld [vmem:[%s110 + $0x90] sm:$0xff]
      %v189 = vld [vmem:[%s110 + $0x98] sm:$0xff]
      %v190 = vld [vmem:[%s110 + $0xa0] sm:$0xff]
      %v191 = vld [vmem:[%s110 + $0xa8] sm:$0xff]
      %v192 = vsel %vm121, %v186, 0.0
      %v193 = vsel %vm121, %v187, 0.0
      %v194 = vadd.f32 %v192, %v193
      %v195 = vsel %vm121, %v188, 0.0
      %v196 = vadd.f32 %v194, %v195
      %v197 = vsel %vm121, %v189, 0.0
      %v198 = vadd.f32 %v196, %v197
      %v199 = vsel %vm121, %v190, 0.0
      %v200 = vadd.f32 %v198, %v199
      %v201 = vsel %vm121, %v191, 0.0
      %v202 = vadd.f32 %v200, %v201
      %v203 = vrot.slane %v202, 4
      %v204 = vadd.f32 %v202, %v203
      %v205 = vrot.slane %v204, 2
      %v206 = vadd.f32 %v204, %v205
      %v207 = vrot.slane %v206, 1
      %v208 = vadd.f32 %v206, %v207
      %v209 = vmul.f32 %v208, 0.020833334
      %v210 = vld [vmem:[%s110 + $0xb0] sm:$0xff]
      %v211 = vld [vmem:[%s110 + $0xb8] sm:$0xff]
      %v212 = vld [vmem:[%s110 + $0xc0] sm:$0xff]
      %v213 = vld [vmem:[%s110 + $0xc8] sm:$0xff]
      %v214 = vld [vmem:[%s110 + $0xd0] sm:$0xff]
      %v215 = vld [vmem:[%s110 + $0xd8] sm:$0xff]
      %v216 = vadd.f32 %v199, %v201
      %v217 = vsel %vm121, %v210, 0.0
      %v218 = vadd.f32 %v216, %v217
      %v219 = vsel %vm121, %v211, 0.0
      %v220 = vadd.f32 %v218, %v219
      %v221 = vsel %vm121, %v212, 0.0
      %v222 = vadd.f32 %v220, %v221
      %v223 = vsel %vm121, %v213, 0.0
      %v224 = vadd.f32 %v222, %v223
      %v225 = vsel %vm121, %v214, 0.0
      %v226 = vadd.f32 %v224, %v225
      %v227 = vsel %vm121, %v215, 0.0
      %v228 = vadd.f32 %v226, %v227
      %v229 = vrot.slane %v228, 4
      %v230 = vadd.f32 %v228, %v229
      %v231 = vrot.slane %v230, 2
      %v232 = vadd.f32 %v230, %v231
      %v233 = vrot.slane %v232, 1
      %v234 = vadd.f32 %v232, %v233
      %v235 = vmul.f32 %v234, 0.015625
      %v236 = vld [vmem:[%s110 + $0xe0] sm:$0xff]
      %v237 = vld [vmem:[%s110 + $0xe8] sm:$0xff]
      %v238 = vld [vmem:[%s110 + $0xf0] sm:$0xff]
      %v239 = vld [vmem:[%s110 + $0xf8] sm:$0xff]
      %v240 = vadd.f32 %v225, %v227
      %v241 = vsel %vm121, %v236, 0.0
      %v242 = vadd.f32 %v240, %v241
      %v243 = vsel %vm121, %v237, 0.0
      %v244 = vadd.f32 %v242, %v243
      %v245 = vsel %vm121, %v238, 0.0
      %v246 = vadd.f32 %v244, %v245
      %v247 = vsel %vm121, %v239, 0.0
      %v248 = vadd.f32 %v246, %v247
      %v249 = vrot.slane %v248, 4
      %v250 = vadd.f32 %v248, %v249
      %v251 = vrot.slane %v250, 2
      %v252 = vadd.f32 %v250, %v251
      %v253 = vrot.slane %v252, 1
      %v254 = vadd.f32 %v252, %v253
      %v255 = vmul.f32 %v254, 0.020833334
      %vm256 = vcmask 1040384
      %v257 = vsel %vm256, %v139, %v165
      %vm258 = vcmask 1041408
      %v259 = vsel %vm258, %v257, %v185
      %vm260 = vcmask 1042432
      %v261 = vsel %vm260, %v259, %v209
      %vm262 = vcmask 1043456
      %v263 = vsel %vm262, %v261, %v235
      %vm264 = vcmask 1044480
      %v265 = vsel %vm264, %v263, %v255
      %vm266 = vcmask 29696
      %267 = vst.msk [vmem:[%s114] sm:$0x3f] %vm266, %v265
      %p268 = scmp.lt.s32.totalorder %s12, 1
      %s269 = scalar_select %p268, %s12, 1
      %s270 = smul.addr %s269, 8
      %s271 = scalar_lea.vmem %s1, %s270
      // Predicated region
      $region25: #{tpu_custom_call.1} parent=23 // pred_check
        %p272 = pneg %p56
      $region26: #{tpu_custom_call.1} parent=23 // pred_check_branch
        %274 = sbr.rel (%p272) target = $region28
      $region27: #{tpu_custom_call.1} parent=23 // pred_region
        _
      $region28: #{tpu_custom_call.1} parent=23 // pred_fallthru
        _
    $region24: #{tpu_custom_call.1} parent=5 // pred_fallthru
      _
    %p275 = scmp.le.s32.totalorder 2, %s7
    // Predicated region
    $region29: #{tpu_custom_call.1} parent=5 // pred_check
      %p276 = pneg %p275
    $region30: #{tpu_custom_call.1} parent=5 // pred_check_branch
      %278 = sbr.rel (%p276) target = $region32
    $region31: #{tpu_custom_call.1} parent=5 // pred_region
      %s279 = ssub.s32 %s7, 2
      // Predicated region
      $region33: #{tpu_custom_call.1} parent=31 // pred_check
        %p280 = pneg %p62
      $region34: #{tpu_custom_call.1} parent=31 // pred_check_branch
        %282 = sbr.rel (%p280) target = $region36
      $region35: #{tpu_custom_call.1} parent=31 // pred_region
        %p283 = scmp.lt.s32.totalorder %s13, 1
        %s284 = scalar_select %p283, %s13, 1
        %s285 = smul.addr %s284, 8
        %s286 = scalar_lea.vmem %s1, %s285
      $region36: #{tpu_custom_call.1} parent=31 // pred_fallthru
        _
    $region32: #{tpu_custom_call.1} parent=5 // pred_fallthru
      _
  $region6: #{tpu_custom_call.1} parent=0 // loop_footer
    %s11 = sadd.s32 1, %s7
  $region7: #{tpu_custom_call.1} parent=0 // loop_footer_branch
    %6 = sbr.rel target = $region3
  $region8: #{tpu_custom_call.1} parent=0 // loop_exit
    _

</llo_original>
